<compile_context>
chip_gen: v5e
topology: v5e:2x2
jax: 0.10.0
libtpu: 0.0.40
codegen_flags: <defaults>
</compile_context>

<pallas_src>
import functools

import jax
import jax.numpy as jnp
import numpy as np
from jax.experimental import pallas as pl
from jax.experimental.pallas import tpu as pltpu

QUANT_LEVELS = 127.0  # symmetric int8 fake-quantization (per vocab row)


def _fake_quant_rows(rows_f32):
    """Symmetric per-row int8 fake quantization of a (T, D) float32 block."""
    absmax = jnp.max(jnp.abs(rows_f32), axis=-1, keepdims=True)      # (T, 1)
    scale = absmax / QUANT_LEVELS
    safe = jnp.where(scale > 0.0, scale, 1.0)                        # avoid /0
    q = jnp.clip(jnp.round(rows_f32 / safe), -QUANT_LEVELS, QUANT_LEVELS)
    return q * safe   # all-zero rows give q == 0 -> exact 0 output


# ---------------------------------------------------------------------------
# Small-table fast path: VMEM-resident table, in-VMEM row gather.
# ---------------------------------------------------------------------------
def _qembedding_vmem_kernel(ids_ref, w_ref, o_ref, *, tokens_per_block):
    """ids_ref: SMEM (N,) int32; w_ref: VMEM (V, D); o_ref: VMEM (TB, D)."""
    base = pl.program_id(0) * tokens_per_block

    # Statically unrolled gather of TB rows from the resident table.
    for t in range(tokens_per_block):
        idx = ids_ref[base + t]
        o_ref[pl.ds(t, 1), :] = w_ref[pl.ds(idx, 1), :]

    # One vectorized (TB, D) quantize pass, single dense lane-packed store.
    rows = o_ref[...].astype(jnp.float32)
    o_ref[...] = _fake_quant_rows(rows).astype(o_ref.dtype)


# ---------------------------------------------------------------------------
# General path: table in HBM, per-row DMA gather, cross-block prefetch.
# ---------------------------------------------------------------------------
def _qembedding_gather_kernel(ids_ref, w_hbm, o_ref, rows_vmem, sems, *,
                              tokens_per_block, n_inner):
    """ids_ref : SMEM (N,) int32      -- scalar-prefetched token ids
       w_hbm   : ANY/HBM (V, D)       -- embedding table, never VMEM-resident
       o_ref   : VMEM (TB, D)         -- quantized rows for this token block
       rows_vmem: VMEM (2, TB, D)     -- double-buffered gather landing buffer
       sems    : DMA sems (2,)        -- one aggregate semaphore per slot
    """
    tb = tokens_per_block
    outer = pl.program_id(0)
    inner = pl.program_id(1)
    slot = inner % 2

    def issue_block(block_idx, slot_idx):
        base = block_idx * tb
        # Unrolled issue: all TB row copies proceed concurrently and all
        # signal the same per-slot semaphore (aggregate completion).
        for t in range(tb):
            row = ids_ref[base + t]
            pltpu.make_async_copy(
                w_hbm.at[pl.ds(row, 1), :],
                rows_vmem.at[slot_idx, pl.ds(t, 1), :],
                sems.at[slot_idx],
            ).start()

    # Prime the pipeline at the first inner step of this core's slice.
    @pl.when(inner == 0)
    def _():
        issue_block(outer * n_inner, 0)

    # Prefetch the NEXT token block's rows before computing on this one.
    # The inner axis is "arbitrary" (sequential per core), so +1 is correct.
    @pl.when(inner + 1 < n_inner)
    def _():
        issue_block(outer * n_inner + inner + 1, 1 - slot)

    # Single aggregate wait: the TB row copies for this block each signalled
    # sems[slot] with D*itemsize bytes; waiting on a descriptor whose dst is
    # the full (TB, D) slot waits for exactly the summed bytes. (The src ref
    # is only used for shape/dtype of the descriptor; the copy is never
    # started.)
    pltpu.make_async_copy(rows_vmem.at[slot], rows_vmem.at[slot],
                          sems.at[slot]).wait()

    rows = rows_vmem[slot].astype(jnp.float32)
    o_ref[...] = _fake_quant_rows(rows).astype(o_ref.dtype)
    # TODO(synk): for very large D (>= ~4096) split the quantize pass into a
    # lane-tiled absmax pass plus D-chunked quantize/store to bound the f32
    # temporaries (matters inside v7x's 64 MiB VMEM).


# ---------------------------------------------------------------------------
# Wrapper
# ---------------------------------------------------------------------------
def _round_up(x, m):
    return (x + m - 1) // m * m


def _auto_tokens_per_block(n_tokens, d, requested):
    if requested is None:
        # Keep ~8 live (TB, D) f32-sized buffers (double-buffered output,
        # double-buffered gather scratch, f32 temporaries) under ~8 MiB so the
        # same TB is safe on v5e's 16 MiB scoped default and v7x's 64 MiB VMEM.
        budget = 8 * 1024 * 1024
        tb = max(8, min(256, budget // (8 * d * 4)))
    else:
        tb = max(1, int(requested))
    tb = min(tb, _round_up(max(n_tokens, 1), 8))
    return _round_up(tb, 8)


def qembedding(x, weight, *, tokens_per_block=None,
               vmem_table_bytes=4 * 1024 * 1024):
    """Pallas TPU implementation of QEmbedding.forward(x)."""
    V, D = weight.shape
    out_dtype = weight.dtype
    itemsize = jnp.dtype(weight.dtype).itemsize

    ids = x.reshape(-1).astype(jnp.int32)
    # F.embedding raises on out-of-range ids; we clamp so a bad id can never
    # drive an out-of-bounds HBM DMA (documented behavioral difference).
    ids = jnp.clip(ids, 0, V - 1)
    n_tokens = int(ids.shape[0])

    tb = _auto_tokens_per_block(n_tokens, D, tokens_per_block)
    n_padded = _round_up(n_tokens, tb)
    if n_padded != n_tokens:
        ids = jnp.concatenate(
            [ids, jnp.zeros((n_padded - n_tokens,), jnp.int32)])
    n_blocks = n_padded // tb
    # TODO(synk): for very large token counts (>~256K) block the ids into
    # per-step SMEM tiles instead of scalar-prefetching the whole vector
    # (1-D i32[N] in SMEM pads to next_pow2(4N) bytes).

    table_bytes = V * D * itemsize

    if table_bytes <= vmem_table_bytes:
        # ---- small-table fast path: VMEM-resident table, in-VMEM gather ----
        est = 2 * table_bytes + 2 * tb * D * itemsize + 4 * tb * D * 4
        out_flat = pl.pallas_call(
            functools.partial(_qembedding_vmem_kernel, tokens_per_block=tb),
            out_shape=jax.ShapeDtypeStruct((n_padded, D), out_dtype),
            grid_spec=pltpu.PrefetchScalarGridSpec(
                num_scalar_prefetch=1,                      # ids -> SMEM
                grid=(n_blocks,),
                in_specs=[pl.BlockSpec((V, D), lambda i, _ids: (0, 0))],
                out_specs=pl.BlockSpec((tb, D), lambda i, _ids: (i, 0)),
            ),
            compiler_params=pltpu.CompilerParams(
                dimension_semantics=("parallel",),
                vmem_limit_bytes=int(min(48 << 20, max(32 << 20, 2 * est))),
            ),
        )(ids, weight)
    else:
        # ---- general path: HBM table, pipelined per-row DMA gather ---------
        # Leading parallel axis (size 2 when the block count allows) lets
        # v7x's two TensorCores split the token blocks; the inner axis is
        # sequential so the next-block prefetch is well defined per core.
        n_outer = 2 if (n_blocks >= 2 and n_blocks % 2 == 0) else 1
        n_inner = n_blocks // n_outer
        est = 4 * tb * D * itemsize + 4 * tb * D * 4
        out_flat = pl.pallas_call(
            functools.partial(_qembedding_gather_kernel,
                              tokens_per_block=tb, n_inner=n_inner),
            out_shape=jax.ShapeDtypeStruct((n_padded, D), out_dtype),
            grid_spec=pltpu.PrefetchScalarGridSpec(
                num_scalar_prefetch=1,                      # ids -> SMEM
                grid=(n_outer, n_inner),
                in_specs=[pl.BlockSpec(memory_space=pl.ANY)],   # table in HBM
                out_specs=pl.BlockSpec(
                    (tb, D), lambda o, i, _ids: (o * n_inner + i, 0)),
                scratch_shapes=[
                    pltpu.VMEM((2, tb, D), weight.dtype),   # double-buffered gather
                    pltpu.SemaphoreType.DMA((2,)),          # one aggregate sem/slot
                ],
            ),
            compiler_params=pltpu.CompilerParams(
                dimension_semantics=("parallel", "arbitrary"),
                vmem_limit_bytes=int(min(48 << 20, max(32 << 20, 2 * est))),
            ),
        )(ids, weight)

    return out_flat[:n_tokens].reshape(x.shape + (D,))


def qembedding_ref(x, weight):
    """Pure-JAX reference (per-row symmetric fake-quant, then embedding gather)."""
    w = weight.astype(jnp.float32)
    absmax = jnp.max(jnp.abs(w), axis=1, keepdims=True)
    scale = absmax / QUANT_LEVELS
    safe = jnp.where(scale > 0.0, scale, 1.0)
    q = jnp.clip(jnp.round(w / safe), -QUANT_LEVELS, QUANT_LEVELS)
    w_q = (q * safe).astype(weight.dtype)
    return jnp.take(w_q, x, axis=0)


if __name__ == "__main__":
    # Small shapes consistent with nn.Embedding(num_embeddings=V, embedding_dim=D)
    V, D = 32, 128          # vocab size, embedding dim (lane-aligned)
    B, S = 2, 8             # batch, sequence -> 16 tokens

    key = jax.random.PRNGKey(0)
    k_w, k_x, k_x3 = jax.random.split(key, 3)
    weight = jax.random.normal(k_w, (V, D), dtype=jnp.float32)
    x = jax.random.randint(k_x, (B, S), 0, V, dtype=jnp.int32)

    ref = jax.block_until_ready(qembedding_ref(x, weight))

    # 1) Default dispatch -> small-table fast path (VMEM-resident gather).
    out = jax.block_until_ready(qembedding(x, weight))
    np.testing.assert_allclose(np.asarray(out), np.asarray(ref),
                               rtol=1e-6, atol=1e-6)
    assert out.shape == (B, S, D) and out.dtype == weight.dtype

    # 2) Force the general HBM-gather path (single block, exercises padding).
    out2 = jax.block_until_ready(qembedding(x, weight, vmem_table_bytes=0))
    np.testing.assert_allclose(np.asarray(out2), np.asarray(ref),
                               rtol=1e-6, atol=1e-6)

    # 3) General path with a multi-block grid: exercises the double-buffered
    #    cross-block prefetch, the aggregate wait, and the 2-core block split.
    x3 = jax.random.randint(k_x3, (4, 16), 0, V, dtype=jnp.int32)
    ref3 = jax.block_until_ready(qembedding_ref(x3, weight))
    out3 = jax.block_until_ready(
        qembedding(x3, weight, tokens_per_block=8, vmem_table_bytes=0))
    np.testing.assert_allclose(np.asarray(out3), np.asarray(ref3),
                               rtol=1e-6, atol=1e-6)

    print("KERNEL_OK")
</pallas_src>

<mosaic_0001>
module attributes {stable_mosaic.version = 11 : i64} {
  func.func @_qembedding_vmem_kernel(%arg0: i32, %arg1: memref<16xi32, #tpu.memory_space<smem>>, %arg2: memref<32x128xf32, #tpu.memory_space<vmem>>, %arg3: memref<16x128xf32, #tpu.memory_space<vmem>>) attributes {dimension_semantics = [#tpu.dimension_semantics<parallel>], iteration_bounds = array<i64: 1>, scalar_prefetch = 1 : i64, scratch_operands = 0 : i64, tpu.core_type = #tpu.core_type<tc>, window_params = [{pipeline_mode = #tpu.pipeline_mode<synchronous>, transform_indices = @transform_0, window_bounds = array<i64: 32, 128>}, {transform_indices = @transform_1, window_bounds = array<i64: 16, 128>}]} {
    %c16_i32 = arith.constant 16 : i32
    %0 = arith.muli %arg0, %c16_i32 : i32
    %c0_i32 = arith.constant 0 : i32
    %1 = arith.addi %0, %c0_i32 : i32
    %2 = arith.index_cast %1 : i32 to index
    %3 = memref.load %arg1[%2] : memref<16xi32, #tpu.memory_space<smem>>
    %4 = arith.index_cast %3 : i32 to index
    %c0 = arith.constant 0 : index
    %5 = vector.load %arg2[%4, %c0] : memref<32x128xf32, #tpu.memory_space<vmem>>, vector<1x128xf32>
    %c0_0 = arith.constant 0 : index
    %c0_1 = arith.constant 0 : index
    %6 = vector.load %arg3[%c0_0, %c0_1] : memref<16x128xf32, #tpu.memory_space<vmem>>, vector<1x128xf32>
    tpu.vector_store %arg3[%c0_0, %c0_1], %5 {strides = array<i32>} : memref<16x128xf32, #tpu.memory_space<vmem>>, vector<1x128xf32>,
    %c1_i32 = arith.constant 1 : i32
    %7 = arith.addi %0, %c1_i32 : i32
    %8 = arith.index_cast %7 : i32 to index
    %9 = memref.load %arg1[%8] : memref<16xi32, #tpu.memory_space<smem>>
    %10 = arith.index_cast %9 : i32 to index
    %c0_2 = arith.constant 0 : index
    %11 = vector.load %arg2[%10, %c0_2] : memref<32x128xf32, #tpu.memory_space<vmem>>, vector<1x128xf32>
    %c1 = arith.constant 1 : index
    %c0_3 = arith.constant 0 : index
    %12 = vector.load %arg3[%c1, %c0_3] : memref<16x128xf32, #tpu.memory_space<vmem>>, vector<1x128xf32>
    tpu.vector_store %arg3[%c1, %c0_3], %11 {strides = array<i32>} : memref<16x128xf32, #tpu.memory_space<vmem>>, vector<1x128xf32>,
    %c2_i32 = arith.constant 2 : i32
    %13 = arith.addi %0, %c2_i32 : i32
    %14 = arith.index_cast %13 : i32 to index
    %15 = memref.load %arg1[%14] : memref<16xi32, #tpu.memory_space<smem>>
    %16 = arith.index_cast %15 : i32 to index
    %c0_4 = arith.constant 0 : index
    %17 = vector.load %arg2[%16, %c0_4] : memref<32x128xf32, #tpu.memory_space<vmem>>, vector<1x128xf32>
    %c2 = arith.constant 2 : index
    %c0_5 = arith.constant 0 : index
    %18 = vector.load %arg3[%c2, %c0_5] : memref<16x128xf32, #tpu.memory_space<vmem>>, vector<1x128xf32>
    tpu.vector_store %arg3[%c2, %c0_5], %17 {strides = array<i32>} : memref<16x128xf32, #tpu.memory_space<vmem>>, vector<1x128xf32>,
    %c3_i32 = arith.constant 3 : i32
    %19 = arith.addi %0, %c3_i32 : i32
    %20 = arith.index_cast %19 : i32 to index
    %21 = memref.load %arg1[%20] : memref<16xi32, #tpu.memory_space<smem>>
    %22 = arith.index_cast %21 : i32 to index
    %c0_6 = arith.constant 0 : index
    %23 = vector.load %arg2[%22, %c0_6] : memref<32x128xf32, #tpu.memory_space<vmem>>, vector<1x128xf32>
    %c3 = arith.constant 3 : index
    %c0_7 = arith.constant 0 : index
    %24 = vector.load %arg3[%c3, %c0_7] : memref<16x128xf32, #tpu.memory_space<vmem>>, vector<1x128xf32>
    tpu.vector_store %arg3[%c3, %c0_7], %23 {strides = array<i32>} : memref<16x128xf32, #tpu.memory_space<vmem>>, vector<1x128xf32>,
    %c4_i32 = arith.constant 4 : i32
    %25 = arith.addi %0, %c4_i32 : i32
    %26 = arith.index_cast %25 : i32 to index
    %27 = memref.load %arg1[%26] : memref<16xi32, #tpu.memory_space<smem>>
    %28 = arith.index_cast %27 : i32 to index
    %c0_8 = arith.constant 0 : index
    %29 = vector.load %arg2[%28, %c0_8] : memref<32x128xf32, #tpu.memory_space<vmem>>, vector<1x128xf32>
    %c4 = arith.constant 4 : index
    %c0_9 = arith.constant 0 : index
    %30 = vector.load %arg3[%c4, %c0_9] : memref<16x128xf32, #tpu.memory_space<vmem>>, vector<1x128xf32>
    tpu.vector_store %arg3[%c4, %c0_9], %29 {strides = array<i32>} : memref<16x128xf32, #tpu.memory_space<vmem>>, vector<1x128xf32>,
    %c5_i32 = arith.constant 5 : i32
    %31 = arith.addi %0, %c5_i32 : i32
    %32 = arith.index_cast %31 : i32 to index
    %33 = memref.load %arg1[%32] : memref<16xi32, #tpu.memory_space<smem>>
    %34 = arith.index_cast %33 : i32 to index
    %c0_10 = arith.constant 0 : index
    %35 = vector.load %arg2[%34, %c0_10] : memref<32x128xf32, #tpu.memory_space<vmem>>, vector<1x128xf32>
    %c5 = arith.constant 5 : index
    %c0_11 = arith.constant 0 : index
    %36 = vector.load %arg3[%c5, %c0_11] : memref<16x128xf32, #tpu.memory_space<vmem>>, vector<1x128xf32>
    tpu.vector_store %arg3[%c5, %c0_11], %35 {strides = array<i32>} : memref<16x128xf32, #tpu.memory_space<vmem>>, vector<1x128xf32>,
    %c6_i32 = arith.constant 6 : i32
    %37 = arith.addi %0, %c6_i32 : i32
    %38 = arith.index_cast %37 : i32 to index
    %39 = memref.load %arg1[%38] : memref<16xi32, #tpu.memory_space<smem>>
    %40 = arith.index_cast %39 : i32 to index
    %c0_12 = arith.constant 0 : index
    %41 = vector.load %arg2[%40, %c0_12] : memref<32x128xf32, #tpu.memory_space<vmem>>, vector<1x128xf32>
    %c6 = arith.constant 6 : index
    %c0_13 = arith.constant 0 : index
    %42 = vector.load %arg3[%c6, %c0_13] : memref<16x128xf32, #tpu.memory_space<vmem>>, vector<1x128xf32>
    tpu.vector_store %arg3[%c6, %c0_13], %41 {strides = array<i32>} : memref<16x128xf32, #tpu.memory_space<vmem>>, vector<1x128xf32>,
    %c7_i32 = arith.constant 7 : i32
    %43 = arith.addi %0, %c7_i32 : i32
    %44 = arith.index_cast %43 : i32 to index
    %45 = memref.load %arg1[%44] : memref<16xi32, #tpu.memory_space<smem>>
    %46 = arith.index_cast %45 : i32 to index
    %c0_14 = arith.constant 0 : index
    %47 = vector.load %arg2[%46, %c0_14] : memref<32x128xf32, #tpu.memory_space<vmem>>, vector<1x128xf32>
    %c7 = arith.constant 7 : index
    %c0_15 = arith.constant 0 : index
    %48 = vector.load %arg3[%c7, %c0_15] : memref<16x128xf32, #tpu.memory_space<vmem>>, vector<1x128xf32>
    tpu.vector_store %arg3[%c7, %c0_15], %47 {strides = array<i32>} : memref<16x128xf32, #tpu.memory_space<vmem>>, vector<1x128xf32>,
    %c8_i32 = arith.constant 8 : i32
    %49 = arith.addi %0, %c8_i32 : i32
    %50 = arith.index_cast %49 : i32 to index
    %51 = memref.load %arg1[%50] : memref<16xi32, #tpu.memory_space<smem>>
    %52 = arith.index_cast %51 : i32 to index
    %c0_16 = arith.constant 0 : index
    %53 = vector.load %arg2[%52, %c0_16] : memref<32x128xf32, #tpu.memory_space<vmem>>, vector<1x128xf32>
    %c8 = arith.constant 8 : index
    %c0_17 = arith.constant 0 : index
    %54 = vector.load %arg3[%c8, %c0_17] : memref<16x128xf32, #tpu.memory_space<vmem>>, vector<1x128xf32>
    tpu.vector_store %arg3[%c8, %c0_17], %53 {strides = array<i32>} : memref<16x128xf32, #tpu.memory_space<vmem>>, vector<1x128xf32>,
    %c9_i32 = arith.constant 9 : i32
    %55 = arith.addi %0, %c9_i32 : i32
    %56 = arith.index_cast %55 : i32 to index
    %57 = memref.load %arg1[%56] : memref<16xi32, #tpu.memory_space<smem>>
    %58 = arith.index_cast %57 : i32 to index
    %c0_18 = arith.constant 0 : index
    %59 = vector.load %arg2[%58, %c0_18] : memref<32x128xf32, #tpu.memory_space<vmem>>, vector<1x128xf32>
    %c9 = arith.constant 9 : index
    %c0_19 = arith.constant 0 : index
    %60 = vector.load %arg3[%c9, %c0_19] : memref<16x128xf32, #tpu.memory_space<vmem>>, vector<1x128xf32>
    tpu.vector_store %arg3[%c9, %c0_19], %59 {strides = array<i32>} : memref<16x128xf32, #tpu.memory_space<vmem>>, vector<1x128xf32>,
    %c10_i32 = arith.constant 10 : i32
    %61 = arith.addi %0, %c10_i32 : i32
    %62 = arith.index_cast %61 : i32 to index
    %63 = memref.load %arg1[%62] : memref<16xi32, #tpu.memory_space<smem>>
    %64 = arith.index_cast %63 : i32 to index
    %c0_20 = arith.constant 0 : index
    %65 = vector.load %arg2[%64, %c0_20] : memref<32x128xf32, #tpu.memory_space<vmem>>, vector<1x128xf32>
    %c10 = arith.constant 10 : index
    %c0_21 = arith.constant 0 : index
    %66 = vector.load %arg3[%c10, %c0_21] : memref<16x128xf32, #tpu.memory_space<vmem>>, vector<1x128xf32>
    tpu.vector_store %arg3[%c10, %c0_21], %65 {strides = array<i32>} : memref<16x128xf32, #tpu.memory_space<vmem>>, vector<1x128xf32>,
    %c11_i32 = arith.constant 11 : i32
    %67 = arith.addi %0, %c11_i32 : i32
    %68 = arith.index_cast %67 : i32 to index
    %69 = memref.load %arg1[%68] : memref<16xi32, #tpu.memory_space<smem>>
    %70 = arith.index_cast %69 : i32 to index
    %c0_22 = arith.constant 0 : index
    %71 = vector.load %arg2[%70, %c0_22] : memref<32x128xf32, #tpu.memory_space<vmem>>, vector<1x128xf32>
    %c11 = arith.constant 11 : index
    %c0_23 = arith.constant 0 : index
    %72 = vector.load %arg3[%c11, %c0_23] : memref<16x128xf32, #tpu.memory_space<vmem>>, vector<1x128xf32>
    tpu.vector_store %arg3[%c11, %c0_23], %71 {strides = array<i32>} : memref<16x128xf32, #tpu.memory_space<vmem>>, vector<1x128xf32>,
    %c12_i32 = arith.constant 12 : i32
    %73 = arith.addi %0, %c12_i32 : i32
    %74 = arith.index_cast %73 : i32 to index
    %75 = memref.load %arg1[%74] : memref<16xi32, #tpu.memory_space<smem>>
    %76 = arith.index_cast %75 : i32 to index
    %c0_24 = arith.constant 0 : index
    %77 = vector.load %arg2[%76, %c0_24] : memref<32x128xf32, #tpu.memory_space<vmem>>, vector<1x128xf32>
    %c12 = arith.constant 12 : index
    %c0_25 = arith.constant 0 : index
    %78 = vector.load %arg3[%c12, %c0_25] : memref<16x128xf32, #tpu.memory_space<vmem>>, vector<1x128xf32>
    tpu.vector_store %arg3[%c12, %c0_25], %77 {strides = array<i32>} : memref<16x128xf32, #tpu.memory_space<vmem>>, vector<1x128xf32>,
    %c13_i32 = arith.constant 13 : i32
    %79 = arith.addi %0, %c13_i32 : i32
    %80 = arith.index_cast %79 : i32 to index
    %81 = memref.load %arg1[%80] : memref<16xi32, #tpu.memory_space<smem>>
    %82 = arith.index_cast %81 : i32 to index
    %c0_26 = arith.constant 0 : index
    %83 = vector.load %arg2[%82, %c0_26] : memref<32x128xf32, #tpu.memory_space<vmem>>, vector<1x128xf32>
    %c13 = arith.constant 13 : index
    %c0_27 = arith.constant 0 : index
    %84 = vector.load %arg3[%c13, %c0_27] : memref<16x128xf32, #tpu.memory_space<vmem>>, vector<1x128xf32>
    tpu.vector_store %arg3[%c13, %c0_27], %83 {strides = array<i32>} : memref<16x128xf32, #tpu.memory_space<vmem>>, vector<1x128xf32>,
    %c14_i32 = arith.constant 14 : i32
    %85 = arith.addi %0, %c14_i32 : i32
    %86 = arith.index_cast %85 : i32 to index
    %87 = memref.load %arg1[%86] : memref<16xi32, #tpu.memory_space<smem>>
    %88 = arith.index_cast %87 : i32 to index
    %c0_28 = arith.constant 0 : index
    %89 = vector.load %arg2[%88, %c0_28] : memref<32x128xf32, #tpu.memory_space<vmem>>, vector<1x128xf32>
    %c14 = arith.constant 14 : index
    %c0_29 = arith.constant 0 : index
    %90 = vector.load %arg3[%c14, %c0_29] : memref<16x128xf32, #tpu.memory_space<vmem>>, vector<1x128xf32>
    tpu.vector_store %arg3[%c14, %c0_29], %89 {strides = array<i32>} : memref<16x128xf32, #tpu.memory_space<vmem>>, vector<1x128xf32>,
    %c15_i32 = arith.constant 15 : i32
    %91 = arith.addi %0, %c15_i32 : i32
    %92 = arith.index_cast %91 : i32 to index
    %93 = memref.load %arg1[%92] : memref<16xi32, #tpu.memory_space<smem>>
    %94 = arith.index_cast %93 : i32 to index
    %c0_30 = arith.constant 0 : index
    %95 = vector.load %arg2[%94, %c0_30] : memref<32x128xf32, #tpu.memory_space<vmem>>, vector<1x128xf32>
    %c15 = arith.constant 15 : index
    %c0_31 = arith.constant 0 : index
    %96 = vector.load %arg3[%c15, %c0_31] : memref<16x128xf32, #tpu.memory_space<vmem>>, vector<1x128xf32>
    tpu.vector_store %arg3[%c15, %c0_31], %95 {strides = array<i32>} : memref<16x128xf32, #tpu.memory_space<vmem>>, vector<1x128xf32>,
    %c0_32 = arith.constant 0 : index
    %c0_33 = arith.constant 0 : index
    %97 = vector.load %arg3[%c0_32, %c0_33] : memref<16x128xf32, #tpu.memory_space<vmem>>, vector<16x128xf32>
    %98 = math.absf %97 : vector<16x128xf32>
    %cst = arith.constant dense<0xFF800000> : vector<16xf32>
    %99 = vector.multi_reduction <maximumf>, %98, %cst [1] : vector<16x128xf32> to vector<16xf32>
    %100 = vector.shape_cast %99 : vector<16xf32> to vector<16x1xf32>
    %cst_34 = arith.constant 1.270000e+02 : f32
    %101 = vector.broadcast %cst_34 : f32 to vector<16x1xf32>
    %102 = arith.divf %100, %101 : vector<16x1xf32>
    %cst_35 = arith.constant 0.000000e+00 : f32
    %103 = vector.broadcast %cst_35 : f32 to vector<16x1xf32>
    %104 = arith.cmpf ogt, %102, %103 : vector<16x1xf32>
    %cst_36 = arith.constant 1.000000e+00 : f32
    %105 = vector.broadcast %cst_36 : f32 to vector<16x1xf32>
    %106 = arith.select %104, %102, %105 : vector<16x1xi1>, vector<16x1xf32>
    %107 = vector.broadcast %106 : vector<16x1xf32> to vector<16x128xf32>
    %108 = arith.divf %97, %107 : vector<16x128xf32>
    %109 = math.roundeven %108 : vector<16x128xf32>
    %cst_37 = arith.constant -1.270000e+02 : f32
    %cst_38 = arith.constant 1.270000e+02 : f32
    %110 = vector.broadcast %cst_37 : f32 to vector<16x128xf32>
    %111 = arith.maximumf %110, %109 : vector<16x128xf32>
    %112 = vector.broadcast %cst_38 : f32 to vector<16x128xf32>
    %113 = arith.minimumf %112, %111 : vector<16x128xf32>
    %114 = vector.broadcast %106 : vector<16x1xf32> to vector<16x128xf32>
    %115 = arith.mulf %113, %114 : vector<16x128xf32>
    %c0_39 = arith.constant 0 : index
    %c0_40 = arith.constant 0 : index
    %116 = vector.load %arg3[%c0_39, %c0_40] : memref<16x128xf32, #tpu.memory_space<vmem>>, vector<16x128xf32>
    tpu.vector_store %arg3[%c0_39, %c0_40], %115 {strides = array<i32>} : memref<16x128xf32, #tpu.memory_space<vmem>>, vector<16x128xf32>,
    return
  }
  func.func @transform_0(%arg0: i32, %arg1: memref<16xi32, #tpu.memory_space<smem>>) -> (i32, i32) {
    %c0_i32 = arith.constant 0 : i32
    %c0_i32_0 = arith.constant 0 : i32
    %c0_i32_1 = arith.constant 0 : i32
    return %c0_i32, %c0_i32_0 : i32, i32
  }
  func.func @transform_1(%arg0: i32, %arg1: memref<16xi32, #tpu.memory_space<smem>>) -> (i32, i32) {
    %c0_i32 = arith.constant 0 : i32
    %c0_i32_0 = arith.constant 0 : i32
    return %arg0, %c0_i32 : i32, i32
  }
}

</mosaic_0001>

<llo_original>
// kernel: tpu_custom_call.1
$region0: #{tpu_custom_call.1}
  #allocation0 [shape = 'u32[]', space=smem, size = 0x4, offset = 0x4, fixed_abs, tag = 'smem constant byte address 0x4 - core index']
  #allocation1 [shape = 'u32[72,128]{1,0:T(1,128)}', space=vmem, size = 0x9000, scoped, tag = 'internal scratch']
  #allocation2 [shape = 's32[1]{0}', space=sflag, size = 0x4, scoped, tag = 'scoped memory for tpu_custom_call.1']
  #allocation3 [shape = 'u8[512]{0}', space=smem, size = 0x200, scoped, tag = 'prefetched SMEM operand 0']
  %s0 = inlined_call_operand.hbm [shape: s32[16], index: 0, kind: input, shape index: {}]
  %s1 = inlined_call_operand.hbm [shape: f32[32,128], index: 1, kind: input, shape index: {}]
  %s2 = inlined_call_operand.hbm [shape: f32[16,128], index: 2, kind: output, shape index: {}]
  %s3 = sld [smem:[#allocation0]]
  $region18: #{tpu_custom_call.1} parent=0
    _
  %s5 = ssub.s32 1, %s3
  %s6 = scalar_select 0, %s5, %s3
  %s8 = sshll.u32 %s0, 4
  %s9 = int_to_ptr.hbm [resolvable:$true] %s8
  %11 = dma.hbm_to_smem %s9, 16, [#allocation3], [#allocation2]
  %13 = dma.done [#allocation2], 16
  %14 = sfence
  $region1: #{tpu_custom_call.1} parent=0
    #allocation4 [shape = 'u8[16384]{0}', space=vmem, size = 0x4000, scoped, tag = 'input window, operand 1, single buffered']
    #allocation5 [shape = 's32[1]{0}', space=sflag, size = 0x4, scoped, tag = 'scoped memory for tpu_custom_call.1']
    #allocation6 [shape = 's32[1]{0}', space=sflag, size = 0x4, scoped, tag = 'scoped memory for tpu_custom_call.1']
    #allocation7 [shape = 'u8[8192]{0}', space=vmem, size = 0x2000, scoped, tag = 'output window, operand 0, single buffered']
    %15 = vsyncpa [#allocation5], 0
    %16 = vsyncpa [#allocation6], 0
    // Predicated region
    $region2: #{tpu_custom_call.1} parent=1 // pred_check
      _
    $region3: #{tpu_custom_call.1} parent=1 // pred_check_branch
      %18 = sbr.rel (0) target = $region5
    $region4: #{tpu_custom_call.1} parent=1 // pred_region
      %20 = vsyncadd [#allocation5], 0
      %s21 = sshll.u32 %s1, 4
      %s22 = int_to_ptr.hbm [resolvable:$true] %s21
      %s23 = sshll.u32 [#allocation4], 4
      %s24 = int_to_ptr.vmem [resolvable:$true] %s23
      %29 = dma.hbm_to_vmem [thread:$0]  %s22, 512, %s24, [#allocation5], 128, 128, 8
    $region5: #{tpu_custom_call.1} parent=1 // pred_fallthru
      _
    // Predicated region
    $region6: #{tpu_custom_call.1} parent=1 // pred_check
      _
    $region7: #{tpu_custom_call.1} parent=1 // pred_check_branch
      %31 = sbr.rel (0) target = $region9
    $region8: #{tpu_custom_call.1} parent=1 // pred_region
      %33 = dma.done [#allocation5], 512
    $region9: #{tpu_custom_call.1} parent=1 // pred_fallthru
      _
    %s34 = smul.u32 0, 16
    %s35 = sld [smem:[#allocation3 + %s34]]
    %s36 = scalar_lea.vmem [#allocation4], %s35
    %v37 = vld [vmem:[%s36] sm:$0x1]
    %38 = vst [vmem:[#allocation7] sm:$0x1] %v37
    %s39 = sadd.s32 %s34, 1
    %s40 = sld [smem:[#allocation3 + %s39]]
    %s41 = scalar_lea.vmem [#allocation4], %s40
    %v42 = vld [vmem:[%s41] sm:$0x1]
    %43 = vst [vmem:[#allocation7 + $0x1] sm:$0x1] %v42
    %s44 = sadd.s32 %s34, 2
    %s45 = sld [smem:[#allocation3 + %s44]]
    %s46 = scalar_lea.vmem [#allocation4], %s45
    %v47 = vld [vmem:[%s46] sm:$0x1]
    %48 = vst [vmem:[#allocation7 + $0x2] sm:$0x1] %v47
    %s49 = sadd.s32 %s34, 3
    %s50 = sld [smem:[#allocation3 + %s49]]
    %s51 = scalar_lea.vmem [#allocation4], %s50
    %v52 = vld [vmem:[%s51] sm:$0x1]
    %53 = vst [vmem:[#allocation7 + $0x3] sm:$0x1] %v52
    %s54 = sadd.s32 %s34, 4
    %s55 = sld [smem:[#allocation3 + %s54]]
    %s56 = scalar_lea.vmem [#allocation4], %s55
    %v57 = vld [vmem:[%s56] sm:$0x1]
    %58 = vst [vmem:[#allocation7 + $0x4] sm:$0x1] %v57
    %s59 = sadd.s32 %s34, 5
    %s60 = sld [smem:[#allocation3 + %s59]]
    %s61 = scalar_lea.vmem [#allocation4], %s60
    %v62 = vld [vmem:[%s61] sm:$0x1]
    %63 = vst [vmem:[#allocation7 + $0x5] sm:$0x1] %v62
    %s64 = sadd.s32 %s34, 6
    %s65 = sld [smem:[#allocation3 + %s64]]
    %s66 = scalar_lea.vmem [#allocation4], %s65
    %v67 = vld [vmem:[%s66] sm:$0x1]
    %68 = vst [vmem:[#allocation7 + $0x6] sm:$0x1] %v67
    %s69 = sadd.s32 %s34, 7
    %s70 = sld [smem:[#allocation3 + %s69]]
    %s71 = scalar_lea.vmem [#allocation4], %s70
    %v72 = vld [vmem:[%s71] sm:$0x1]
    %73 = vst [vmem:[#allocation7 + $0x7] sm:$0x1] %v72
    %s74 = sadd.s32 %s34, 8
    %s75 = sld [smem:[#allocation3 + %s74]]
    %s76 = scalar_lea.vmem [#allocation4], %s75
    %v77 = vld [vmem:[%s76] sm:$0x1]
    %78 = vst [vmem:[#allocation7 + $0x8] sm:$0x1] %v77
    %s79 = sadd.s32 %s34, 9
    %s80 = sld [smem:[#allocation3 + %s79]]
    %s81 = scalar_lea.vmem [#allocation4], %s80
    %v82 = vld [vmem:[%s81] sm:$0x1]
    %83 = vst [vmem:[#allocation7 + $0x9] sm:$0x1] %v82
    %s84 = sadd.s32 %s34, 10
    %s85 = sld [smem:[#allocation3 + %s84]]
    %s86 = scalar_lea.vmem [#allocation4], %s85
    %v87 = vld [vmem:[%s86] sm:$0x1]
    %88 = vst [vmem:[#allocation7 + $0xa] sm:$0x1] %v87
    %s89 = sadd.s32 %s34, 11
    %s90 = sld [smem:[#allocation3 + %s89]]
    %s91 = scalar_lea.vmem [#allocation4], %s90
    %v92 = vld [vmem:[%s91] sm:$0x1]
    %93 = vst [vmem:[#allocation7 + $0xb] sm:$0x1] %v92
    %s94 = sadd.s32 %s34, 12
    %s95 = sld [smem:[#allocation3 + %s94]]
    %s96 = scalar_lea.vmem [#allocation4], %s95
    %v97 = vld [vmem:[%s96] sm:$0x1]
    %98 = vst [vmem:[#allocation7 + $0xc] sm:$0x1] %v97
    %s99 = sadd.s32 %s34, 13
    %s100 = sld [smem:[#allocation3 + %s99]]
    %s101 = scalar_lea.vmem [#allocation4], %s100
    %v102 = vld [vmem:[%s101] sm:$0x1]
    %103 = vst [vmem:[#allocation7 + $0xd] sm:$0x1] %v102
    %s104 = sadd.s32 %s34, 14
    %s105 = sld [smem:[#allocation3 + %s104]]
    %s106 = scalar_lea.vmem [#allocation4], %s105
    %v107 = vld [vmem:[%s106] sm:$0x1]
    %108 = vst [vmem:[#allocation7 + $0xe] sm:$0x1] %v107
    %s109 = sadd.s32 %s34, 15
    %s110 = sld [smem:[#allocation3 + %s109]]
    %s111 = scalar_lea.vmem [#allocation4], %s110
    %v112 = vld [vmem:[%s111] sm:$0x1]
    %113 = vst [vmem:[#allocation7 + $0xf] sm:$0x1] %v112
    %v114 = vld [vmem:[#allocation7] sm:$0xff]
    %v115 = vld [vmem:[#allocation7 + $0x8] sm:$0xff]
    %v116 = vand.u32 2147483647, %v114
    %v117 = vand.u32 2147483647, %v115
    %118 = vmax.xlane.f32.xlu0 %v116
    %v119 = vpop.xlane.xlu0 %118
    %120 = vmax.xlane.f32.xlu0 %v117
    %v121 = vpop.xlane.xlu0 %120
    %v122 = vrcp.pop 127.0
    %v123 = vmul.f32 127.0, %v122
    %v124 = vsub.f32 1.0, %v123
    %v125 = vmul.f32 %v122, %v124
    %v126 = vadd.f32 %v122, %v125
    %vm127 = vweird.f32 %v122
    %v128 = vsel %vm127, %v122, %v126
    %v129 = vmul.f32 %v119, %v128
    %v130 = vmul.f32 %v121, %v128
    %vm131 = vcmp.gt.f32.partialorder %v129, 0.0
    %vm132 = vcmp.gt.f32.partialorder %v130, 0.0
    %v133 = vsel %vm131, %v129, 1.0
    %v134 = vsel %vm132, %v130, 1.0
    %v135 = vrcp.pop %v133
    %v136 = vmul.f32 %v133, %v135
    %v137 = vsub.f32 1.0, %v136
    %v138 = vmul.f32 %v135, %v137
    %v139 = vadd.f32 %v135, %v138
    %vm140 = vweird.f32 %v133
    %vm141 = vweird.f32 %v135
    %vm142 = vmor %vm140, %vm141
    %v143 = vsel %vm142, %v135, %v139
    %v144 = vand.u32 2147483647, %v133
    %vm145 = vcmp.eq.f32.partialorder %v144, 8.507059e+37
    %v146 = vand.u32 %v133, 2147483648
    %v147 = vor.u32 1.1754944e-38, %v146
    %v148 = vsel %vm145, %v147, %v143
    %v149 = vmul.f32 %v114, %v148
    %v150 = vrcp.pop %v134
    %v151 = vmul.f32 %v134, %v150
    %v152 = vsub.f32 1.0, %v151
    %v153 = vmul.f32 %v150, %v152
    %v154 = vadd.f32 %v150, %v153
    %vm155 = vweird.f32 %v134
    %vm156 = vweird.f32 %v150
    %vm157 = vmor %vm155, %vm156
    %v158 = vsel %vm157, %v150, %v154
    %v159 = vand.u32 2147483647, %v134
    %vm160 = vcmp.eq.f32.partialorder %v159, 8.507059e+37
    %v161 = vand.u32 %v134, 2147483648
    %v162 = vor.u32 1.1754944e-38, %v161
    %v163 = vsel %vm160, %v162, %v158
    %v164 = vmul.f32 %v115, %v163
    %v165 = vround.ne.pseudo %v149
    %v166 = vround.ne.pseudo %v164
    %v167 = vmax.f32 %v165, -127.0
    %v168 = vmax.f32 %v166, -127.0
    %v169 = vmin.f32 %v167, 127.0
    %v170 = vmin.f32 %v168, 127.0
    %v171 = vmul.f32 %v169, %v133
    %v172 = vmul.f32 %v170, %v134
    %173 = vst [vmem:[#allocation7] sm:$0xff] %v171
    %174 = vst [vmem:[#allocation7 + $0x8] sm:$0xff] %v172
    // Predicated region
    $region10: #{tpu_custom_call.1} parent=1 // pred_check
      _
    $region11: #{tpu_custom_call.1} parent=1 // pred_check_branch
      %176 = sbr.rel (0) target = $region13
    $region12: #{tpu_custom_call.1} parent=1 // pred_region
      %178 = vsyncadd [#allocation6], 0
      %s179 = sshll.u32 [#allocation7], 4
      %s180 = int_to_ptr.vmem [resolvable:$true] %s179
      %s181 = sshll.u32 %s2, 4
      %s182 = int_to_ptr.hbm [resolvable:$true] %s181
      %187 = dma.vmem_to_hbm [thread:$0]  %s180, 256, %s182, [#allocation6], 128, 128, 8
    $region13: #{tpu_custom_call.1} parent=1 // pred_fallthru
      _
    // Predicated region
    $region14: #{tpu_custom_call.1} parent=1 // pred_check
      _
    $region15: #{tpu_custom_call.1} parent=1 // pred_check_branch
      %189 = sbr.rel (0) target = $region17
    $region16: #{tpu_custom_call.1} parent=1 // pred_region
      %191 = dma.done [#allocation6], 256
    $region17: #{tpu_custom_call.1} parent=1 // pred_fallthru
      _
    %192 = vsyncpa [#allocation5], 1
    %193 = vsyncpa [#allocation6], 1

</llo_original>
